<compile_context>
chip_gen: v7x
topology: tpu7x:2x2x1
jax: 0.10.0
libtpu: 0.0.40
codegen_flags: <defaults>
</compile_context>

<pallas_src>
import functools

import jax
import jax.numpy as jnp
from jax import lax
from jax.experimental import pallas as pl
from jax.experimental.pallas import tpu as pltpu


def _round_up(x, m):
    return ((x + m - 1) // m) * m


def _temporal_block_kernel(x_ref, w1_ref, b1_ref, *rest,
                           kernel_size, dilation, pad_left, has_downsample):
    # x_ref:  (pad_left + TL, C_in_pad)  -- windowed tile (halo rows first)
    # w1_ref: (K, C_in_pad, C_out_pad)   -- taps already time-reversed
    # b1_ref: (1, C_out_pad) f32
    # rest:   (wd_ref, bd_ref, o_ref) if has_downsample else (o_ref,)
    if has_downsample:
        wd_ref, bd_ref, o_ref = rest
    else:
        (o_ref,) = rest
        wd_ref = bd_ref = None

    tl = o_ref.shape[0]                                    # rows in this L tile

    # Dilated causal conv as K shifted matmuls. Kernel tap t reads x[p - t*d]
    # and (because of the wrapper-side reversal) multiplies PyTorch tap K-1-t.
    # Tap 0 uses the unshifted (sublane-aligned) window and initializes acc.
    x_cur = x_ref[pl.ds(pad_left, tl), :]                  # x[p]
    acc = jnp.dot(x_cur, w1_ref[0], preferred_element_type=jnp.float32)
    for t in range(1, kernel_size):
        off = pad_left - t * dilation                      # static, >= 0
        acc = acc + jnp.dot(x_ref[pl.ds(off, tl), :], w1_ref[t],
                            preferred_element_type=jnp.float32)
    conv_out = jnp.maximum(acc + b1_ref[...], 0.0)         # bias + chomp + ReLU

    # Residual branch (1x1 conv if C_in != C_out, identity otherwise).
    if has_downsample:
        res = jnp.dot(x_cur, wd_ref[...],
                      preferred_element_type=jnp.float32) + bd_ref[...]
    else:
        res = x_cur.astype(jnp.float32)

    o_ref[...] = jnp.maximum(conv_out + res, 0.0).astype(o_ref.dtype)


def temporal_block_forward(x_ncl, params, *, kernel_size, stride, padding,
                           dilation, compute_dtype=jnp.bfloat16, tile_l=512):
    """x_ncl: (N, C_in, L), mirrors the PyTorch NCL Conv1d layout."""
    assert stride == 1, "TCN TemporalBlock uses stride=1"
    # Left-pad-only causal equivalence requires the standard TCN padding.
    assert padding == dilation * (kernel_size - 1), (
        "TemporalBlock kernel requires padding == dilation*(kernel_size-1)")

    N, c_in, L = x_ncl.shape

    # --- weight_norm (wrapper glue): w = g * v / ||v||_(1,2) per out-channel ---
    v = params["conv1_v"].astype(jnp.float32)              # (C_out, C_in, K)
    g = params["conv1_g"].astype(jnp.float32)              # (C_out, 1, 1)
    norm = jnp.sqrt(jnp.sum(v * v, axis=(1, 2), keepdims=True))
    w1 = g * v / norm                                       # (C_out, C_in, K)
    c_out = w1.shape[0]

    # Lane-dense channel padding.
    cin_p = _round_up(c_in, 128)
    cout_p = _round_up(c_out, 128)

    # (K, C_in, C_out), time-REVERSED so kernel tap t (shift t*dilation back in
    # time) pairs with PyTorch tap K-1-t (cross-correlation semantics).
    w1_kio = jnp.transpose(w1, (2, 1, 0))[::-1]
    w1_kio = jnp.pad(w1_kio, ((0, 0), (0, cin_p - c_in),
                              (0, cout_p - c_out))).astype(compute_dtype)
    b1 = jnp.pad(params["conv1_b"].astype(jnp.float32),
                 (0, cout_p - c_out)).reshape(1, cout_p)

    has_downsample = c_in != c_out
    if has_downsample:
        wd = jnp.transpose(params["down_w"][:, :, 0].astype(jnp.float32), (1, 0))
        wd = jnp.pad(wd, ((0, cin_p - c_in),
                          (0, cout_p - c_out))).astype(compute_dtype)
        bd = jnp.pad(params["down_b"].astype(jnp.float32),
                     (0, cout_p - c_out)).reshape(1, cout_p)

    # --- L tiling with halo ---
    TL = _round_up(min(tile_l, max(L, 8)), 8)               # rows per grid step
    nt = -(-L // TL)                                        # cdiv(L, TL)
    pad_left = _round_up(max(padding, 1), 8)                # sublane-aligned halo
    PW = pad_left + TL                                      # window rows per tile

    # NCL -> NLC, cast, pad channels.
    x_nlc = jnp.transpose(x_ncl, (0, 2, 1)).astype(compute_dtype)
    x_nlc = jnp.pad(x_nlc, ((0, 0), (0, 0), (0, cin_p - c_in)))
    # Left-pad (causal zeros) and right-pad L to nt*TL, then build per-tile
    # windows: window j = rows [j*TL, j*TL + PW) of the left-padded signal,
    # i.e. pad_left halo rows followed by the TL tile rows.
    x_lp = jnp.pad(x_nlc, ((0, 0), (pad_left, nt * TL - L), (0, 0)))
    x_win = jnp.stack([x_lp[:, j * TL: j * TL + PW, :] for j in range(nt)],
                      axis=1)                               # (N, nt, PW, cin_p)

    kernel = functools.partial(
        _temporal_block_kernel,
        kernel_size=kernel_size, dilation=dilation,
        pad_left=pad_left, has_downsample=has_downsample)

    in_specs = [
        pl.BlockSpec((None, None, PW, cin_p), lambda n, j: (n, j, 0, 0)),
        pl.BlockSpec((kernel_size, cin_p, cout_p), lambda n, j: (0, 0, 0)),
        pl.BlockSpec((1, cout_p), lambda n, j: (0, 0)),
    ]
    args = [x_win, w1_kio, b1]
    if has_downsample:
        in_specs += [pl.BlockSpec((cin_p, cout_p), lambda n, j: (0, 0)),
                     pl.BlockSpec((1, cout_p), lambda n, j: (0, 0))]
        args += [wd, bd]

    # VMEM budget: double-buffered input window + output tile, plus weights
    # and biases, with headroom, capped under v7x's 64 MiB physical VMEM.
    isz = jnp.dtype(compute_dtype).itemsize
    vmem_est = (2 * PW * cin_p * isz                        # input window (x2)
                + 2 * TL * cout_p * 4                       # output tile (x2)
                + kernel_size * cin_p * cout_p * isz        # conv weights
                + (cin_p * cout_p * isz if has_downsample else 0)
                + 4 * cout_p * 4)                           # biases
    vmem_limit = int(min(48 * 1024 * 1024, max(16 * 1024 * 1024, 4 * vmem_est)))

    out_nlc = pl.pallas_call(
        kernel,
        out_shape=jax.ShapeDtypeStruct((N, nt * TL, cout_p), jnp.float32),
        grid_spec=pltpu.PrefetchScalarGridSpec(
            num_scalar_prefetch=0,
            grid=(N, nt),
            in_specs=in_specs,
            out_specs=pl.BlockSpec((None, TL, cout_p), lambda n, j: (n, j, 0)),
        ),
        compiler_params=pltpu.CompilerParams(
            dimension_semantics=("parallel", "parallel"),
            vmem_limit_bytes=vmem_limit),
    )(*args)

    # Strip L / channel padding, back to NCL.
    return jnp.transpose(out_nlc[:, :L, :c_out], (0, 2, 1))


def _reference_forward(x_ncl, params, *, kernel_size, stride, padding, dilation):
    """Pure-JAX reference using lax.conv_general_dilated (mirrors PyTorch)."""
    v = params["conv1_v"]
    g = params["conv1_g"]
    norm = jnp.sqrt(jnp.sum(v * v, axis=(1, 2), keepdims=True))
    w1 = g * v / norm                                       # (C_out, C_in, K)
    out = lax.conv_general_dilated(
        x_ncl, w1, window_strides=(stride,), padding=[(padding, padding)],
        rhs_dilation=(dilation,), dimension_numbers=("NCH", "OIH", "NCH"))
    out = out + params["conv1_b"][None, :, None]
    if padding > 0:
        out = out[:, :, :-padding]                          # Chomp1d
    out = jnp.maximum(out, 0.0)                             # ReLU
    c_in, c_out = x_ncl.shape[1], w1.shape[0]
    if c_in != c_out:
        res = lax.conv_general_dilated(
            x_ncl, params["down_w"], window_strides=(1,), padding=[(0, 0)],
            dimension_numbers=("NCH", "OIH", "NCH"))
        res = res + params["down_b"][None, :, None]
    else:
        res = x_ncl
    return jnp.maximum(out + res, 0.0)


def _make_params(key, c_in, c_out, kernel_size):
    k1, k2, k3, k4 = jax.random.split(key, 4)
    conv1_v = 0.1 * jax.random.normal(k1, (c_out, c_in, kernel_size), jnp.float32)
    conv1_g = jnp.sqrt(jnp.sum(conv1_v * conv1_v, axis=(1, 2), keepdims=True))
    conv1_b = 0.1 * jax.random.normal(k2, (c_out,), jnp.float32)
    down_w = 0.1 * jax.random.normal(k3, (c_out, c_in, 1), jnp.float32)
    down_b = 0.1 * jax.random.normal(k4, (c_out,), jnp.float32)
    return dict(conv1_v=conv1_v, conv1_g=conv1_g, conv1_b=conv1_b,
                down_w=down_w, down_b=down_b)


if __name__ == "__main__":
    key = jax.random.PRNGKey(0)
    kp, kx1, kp2, kx2 = jax.random.split(key, 4)

    # --- Case 1: C_in != C_out (downsample residual), multi-tile L path ---
    N, C_IN, C_OUT, L = 2, 4, 8, 16
    K, STRIDE, DIL = 3, 1, 2
    PAD = (K - 1) * DIL
    params = _make_params(kp, C_IN, C_OUT, K)
    x = jax.random.normal(kx1, (N, C_IN, L), jnp.float32)
    ref = _reference_forward(x, params, kernel_size=K, stride=STRIDE,
                             padding=PAD, dilation=DIL)

    out_f32 = temporal_block_forward(
        x, params, kernel_size=K, stride=STRIDE, padding=PAD, dilation=DIL,
        compute_dtype=jnp.float32, tile_l=8)                # TL=8 -> 2 L-tiles
    out_f32 = jax.block_until_ready(out_f32)
    assert out_f32.shape == (N, C_OUT, L), out_f32.shape
    assert jnp.allclose(out_f32, ref, atol=1e-5, rtol=1e-5), float(
        jnp.max(jnp.abs(out_f32 - ref)))

    out_bf16 = temporal_block_forward(
        x, params, kernel_size=K, stride=STRIDE, padding=PAD, dilation=DIL,
        compute_dtype=jnp.bfloat16, tile_l=512)             # single L-tile, bf16
    out_bf16 = jax.block_until_ready(out_bf16)
    assert jnp.allclose(out_bf16, ref, atol=3e-2, rtol=5e-2), float(
        jnp.max(jnp.abs(out_bf16 - ref)))

    # --- Case 2: C_in == C_out (identity residual), ragged L ---
    C2, L2, K2, DIL2 = 8, 20, 3, 1
    PAD2 = (K2 - 1) * DIL2
    params2 = _make_params(kp2, C2, C2, K2)
    x2 = jax.random.normal(kx2, (N, C2, L2), jnp.float32)
    ref2 = _reference_forward(x2, params2, kernel_size=K2, stride=1,
                              padding=PAD2, dilation=DIL2)
    out2 = temporal_block_forward(
        x2, params2, kernel_size=K2, stride=1, padding=PAD2, dilation=DIL2,
        compute_dtype=jnp.float32, tile_l=8)                # 3 L-tiles
    out2 = jax.block_until_ready(out2)
    assert out2.shape == (N, C2, L2), out2.shape
    assert jnp.allclose(out2, ref2, atol=1e-5, rtol=1e-5), float(
        jnp.max(jnp.abs(out2 - ref2)))

    print("KERNEL_OK")
</pallas_src>

<mosaic_0001>
module attributes {stable_mosaic.version = 11 : i64} {
  func.func @_temporal_block_kernel(%arg0: i32, %arg1: i32, %arg2: memref<1x1x16x128xf32, #tpu.memory_space<vmem>>, %arg3: memref<3x128x128xf32, #tpu.memory_space<vmem>>, %arg4: memref<1x128xf32, #tpu.memory_space<vmem>>, %arg5: memref<128x128xf32, #tpu.memory_space<vmem>>, %arg6: memref<1x128xf32, #tpu.memory_space<vmem>>, %arg7: memref<1x8x128xf32, #tpu.memory_space<vmem>>) attributes {dimension_semantics = [#tpu.dimension_semantics<parallel>, #tpu.dimension_semantics<parallel>], iteration_bounds = array<i64: 2, 2>, scalar_prefetch = 0 : i64, scratch_operands = 0 : i64, tpu.core_type = #tpu.core_type<tc>, window_params = [{transform_indices = @transform_0, window_bounds = array<i64: 1, 1, 16, 128>}, {pipeline_mode = #tpu.pipeline_mode<synchronous>, transform_indices = @transform_1, window_bounds = array<i64: 3, 128, 128>}, {pipeline_mode = #tpu.pipeline_mode<synchronous>, transform_indices = @transform_2, window_bounds = array<i64: 1, 128>}, {pipeline_mode = #tpu.pipeline_mode<synchronous>, transform_indices = @transform_3, window_bounds = array<i64: 128, 128>}, {pipeline_mode = #tpu.pipeline_mode<synchronous>, transform_indices = @transform_4, window_bounds = array<i64: 1, 128>}, {transform_indices = @transform_5, window_bounds = array<i64: 1, 8, 128>}]} {
    %c0 = arith.constant 0 : index
    %c0_0 = arith.constant 0 : index
    %c8 = arith.constant 8 : index
    %c0_1 = arith.constant 0 : index
    %0 = vector.load %arg2[%c0, %c0_0, %c8, %c0_1] : memref<1x1x16x128xf32, #tpu.memory_space<vmem>>, vector<1x1x8x128xf32>
    %1 = vector.shape_cast %0 : vector<1x1x8x128xf32> to vector<8x128xf32>
    %c0_2 = arith.constant 0 : index
    %c0_3 = arith.constant 0 : index
    %c0_4 = arith.constant 0 : index
    %2 = vector.load %arg3[%c0_2, %c0_3, %c0_4] : memref<3x128x128xf32, #tpu.memory_space<vmem>>, vector<1x128x128xf32>
    %3 = vector.shape_cast %2 : vector<1x128x128xf32> to vector<128x128xf32>
    %cst = arith.constant dense<0.000000e+00> : vector<8x128xf32>
    %4 = tpu.matmul %1, %3, %cst {dimension_numbers = #tpu.dot_dimension_numbers<[1], [0], [0], [1], [0, 0, 1, 1], [], []>} : vector<8x128xf32>, vector<128x128xf32>, vector<8x128xf32> -> vector<8x128xf32>
    %c0_5 = arith.constant 0 : index
    %c0_6 = arith.constant 0 : index
    %c6 = arith.constant 6 : index
    %c0_7 = arith.constant 0 : index
    %5 = vector.load %arg2[%c0_5, %c0_6, %c6, %c0_7] : memref<1x1x16x128xf32, #tpu.memory_space<vmem>>, vector<1x1x8x128xf32>
    %6 = vector.shape_cast %5 : vector<1x1x8x128xf32> to vector<8x128xf32>
    %c1 = arith.constant 1 : index
    %c0_8 = arith.constant 0 : index
    %c0_9 = arith.constant 0 : index
    %7 = vector.load %arg3[%c1, %c0_8, %c0_9] : memref<3x128x128xf32, #tpu.memory_space<vmem>>, vector<1x128x128xf32>
    %8 = vector.shape_cast %7 : vector<1x128x128xf32> to vector<128x128xf32>
    %cst_10 = arith.constant dense<0.000000e+00> : vector<8x128xf32>
    %9 = tpu.matmul %6, %8, %cst_10 {dimension_numbers = #tpu.dot_dimension_numbers<[1], [0], [0], [1], [0, 0, 1, 1], [], []>} : vector<8x128xf32>, vector<128x128xf32>, vector<8x128xf32> -> vector<8x128xf32>
    %10 = arith.addf %4, %9 : vector<8x128xf32>
    %c0_11 = arith.constant 0 : index
    %c0_12 = arith.constant 0 : index
    %c4 = arith.constant 4 : index
    %c0_13 = arith.constant 0 : index
    %11 = vector.load %arg2[%c0_11, %c0_12, %c4, %c0_13] : memref<1x1x16x128xf32, #tpu.memory_space<vmem>>, vector<1x1x8x128xf32>
    %12 = vector.shape_cast %11 : vector<1x1x8x128xf32> to vector<8x128xf32>
    %c2 = arith.constant 2 : index
    %c0_14 = arith.constant 0 : index
    %c0_15 = arith.constant 0 : index
    %13 = vector.load %arg3[%c2, %c0_14, %c0_15] : memref<3x128x128xf32, #tpu.memory_space<vmem>>, vector<1x128x128xf32>
    %14 = vector.shape_cast %13 : vector<1x128x128xf32> to vector<128x128xf32>
    %cst_16 = arith.constant dense<0.000000e+00> : vector<8x128xf32>
    %15 = tpu.matmul %12, %14, %cst_16 {dimension_numbers = #tpu.dot_dimension_numbers<[1], [0], [0], [1], [0, 0, 1, 1], [], []>} : vector<8x128xf32>, vector<128x128xf32>, vector<8x128xf32> -> vector<8x128xf32>
    %16 = arith.addf %10, %15 : vector<8x128xf32>
    %c0_17 = arith.constant 0 : index
    %c0_18 = arith.constant 0 : index
    %17 = vector.load %arg4[%c0_17, %c0_18] : memref<1x128xf32, #tpu.memory_space<vmem>>, vector<1x128xf32>
    %18 = vector.broadcast %17 : vector<1x128xf32> to vector<8x128xf32>
    %19 = arith.addf %16, %18 : vector<8x128xf32>
    %cst_19 = arith.constant 0.000000e+00 : f32
    %20 = vector.broadcast %cst_19 : f32 to vector<8x128xf32>
    %21 = arith.maximumf %19, %20 : vector<8x128xf32>
    %c0_20 = arith.constant 0 : index
    %c0_21 = arith.constant 0 : index
    %22 = vector.load %arg5[%c0_20, %c0_21] : memref<128x128xf32, #tpu.memory_space<vmem>>, vector<128x128xf32>
    %cst_22 = arith.constant dense<0.000000e+00> : vector<8x128xf32>
    %23 = tpu.matmul %1, %22, %cst_22 {dimension_numbers = #tpu.dot_dimension_numbers<[1], [0], [0], [1], [0, 0, 1, 1], [], []>} : vector<8x128xf32>, vector<128x128xf32>, vector<8x128xf32> -> vector<8x128xf32>
    %c0_23 = arith.constant 0 : index
    %c0_24 = arith.constant 0 : index
    %24 = vector.load %arg6[%c0_23, %c0_24] : memref<1x128xf32, #tpu.memory_space<vmem>>, vector<1x128xf32>
    %25 = vector.broadcast %24 : vector<1x128xf32> to vector<8x128xf32>
    %26 = arith.addf %23, %25 : vector<8x128xf32>
    %27 = arith.addf %21, %26 : vector<8x128xf32>
    %cst_25 = arith.constant 0.000000e+00 : f32
    %28 = vector.broadcast %cst_25 : f32 to vector<8x128xf32>
    %29 = arith.maximumf %27, %28 : vector<8x128xf32>
    %c0_26 = arith.constant 0 : index
    %c0_27 = arith.constant 0 : index
    %c0_28 = arith.constant 0 : index
    %30 = vector.load %arg7[%c0_26, %c0_27, %c0_28] : memref<1x8x128xf32, #tpu.memory_space<vmem>>, vector<1x8x128xf32>
    %31 = vector.shape_cast %30 : vector<1x8x128xf32> to vector<8x128xf32>
    %32 = vector.shape_cast %29 : vector<8x128xf32> to vector<1x8x128xf32>
    tpu.vector_store %arg7[%c0_26, %c0_27, %c0_28], %32 {strides = array<i32>} : memref<1x8x128xf32, #tpu.memory_space<vmem>>, vector<1x8x128xf32>,
    return
  }
  func.func @transform_0(%arg0: i32, %arg1: i32) -> (i32, i32, i32, i32) {
    %c0_i32 = arith.constant 0 : i32
    %c0_i32_0 = arith.constant 0 : i32
    %c0_i32_1 = arith.constant 0 : i32
    return %arg0, %arg1, %c0_i32, %c0_i32_0 : i32, i32, i32, i32
  }
  func.func @transform_1(%arg0: i32, %arg1: i32) -> (i32, i32, i32) {
    %c0_i32 = arith.constant 0 : i32
    %c0_i32_0 = arith.constant 0 : i32
    %c0_i32_1 = arith.constant 0 : i32
    %c0_i32_2 = arith.constant 0 : i32
    return %c0_i32, %c0_i32_0, %c0_i32_1 : i32, i32, i32
  }
  func.func @transform_2(%arg0: i32, %arg1: i32) -> (i32, i32) {
    %c0_i32 = arith.constant 0 : i32
    %c0_i32_0 = arith.constant 0 : i32
    %c0_i32_1 = arith.constant 0 : i32
    return %c0_i32, %c0_i32_0 : i32, i32
  }
  func.func @transform_3(%arg0: i32, %arg1: i32) -> (i32, i32) {
    %c0_i32 = arith.constant 0 : i32
    %c0_i32_0 = arith.constant 0 : i32
    %c0_i32_1 = arith.constant 0 : i32
    return %c0_i32, %c0_i32_0 : i32, i32
  }
  func.func @transform_4(%arg0: i32, %arg1: i32) -> (i32, i32) {
    %c0_i32 = arith.constant 0 : i32
    %c0_i32_0 = arith.constant 0 : i32
    %c0_i32_1 = arith.constant 0 : i32
    return %c0_i32, %c0_i32_0 : i32, i32
  }
  func.func @transform_5(%arg0: i32, %arg1: i32) -> (i32, i32, i32) {
    %c0_i32 = arith.constant 0 : i32
    %c0_i32_0 = arith.constant 0 : i32
    return %arg0, %arg1, %c0_i32 : i32, i32, i32
  }
}

</mosaic_0001>

<llo_original>
// kernel: tpu_custom_call.1
$region0: #{tpu_custom_call.1}
  #allocation0 [shape = 'u32[]', space=smem, size = 0x4, offset = 0x4, fixed_abs, tag = 'smem constant byte address 0x4 - core index']
  #allocation1 [shape = 'u32[144,128]{1,0:T(1,128)}', space=vmem, size = 0x12000, scoped, tag = 'internal scratch']
  %s0 = inlined_call_operand.hbm [shape: f32[2,2,16,128], index: 0, kind: input, shape index: {}]
  %s1 = inlined_call_operand.hbm [shape: f32[3,128,128], index: 1, kind: input, shape index: {}]
  %s2 = inlined_call_operand.vmem [shape: f32[1,128], index: 2, kind: input, shape index: {}]
  %s3 = inlined_call_operand.hbm [shape: f32[128,128], index: 3, kind: input, shape index: {}]
  %s4 = inlined_call_operand.vmem [shape: f32[1,128], index: 4, kind: input, shape index: {}]
  %s5 = inlined_call_operand.hbm [shape: f32[2,16,128], index: 5, kind: output, shape index: {}]
  %s6 = sld [smem:[#allocation0]]
  $region65: #{tpu_custom_call.1} parent=0
    _
  %s8 = ssub.s32 1, %s6
  %s9 = scalar_select 0, %s8, %s6
  $region1: #{tpu_custom_call.1} parent=0
    #allocation2 [shape = 'u8[16384]{0}', space=vmem, size = 0x4000, scoped, tag = 'input window, operand 0']
    #allocation3 [shape = 's32[2]{0}', space=sflag, size = 0x8, scoped, tag = 'scoped memory for tpu_custom_call.1']
    #allocation4 [shape = 's32[2]{0}', space=sflag, size = 0x8, scoped, tag = 'scoped memory for tpu_custom_call.1']
    #allocation5 [shape = 'u8[196608]{0}', space=vmem, size = 0x30000, scoped, tag = 'input window, operand 1, single buffered']
    #allocation6 [shape = 's32[1]{0}', space=sflag, size = 0x4, scoped, tag = 'scoped memory for tpu_custom_call.1']
    #allocation7 [shape = 'u8[65536]{0}', space=vmem, size = 0x10000, scoped, tag = 'input window, operand 3, single buffered']
    #allocation8 [shape = 'u8[8192]{0}', space=vmem, size = 0x2000, scoped, tag = 'output window, operand 0']
    %10 = vsyncpa [#allocation3], 0
    %s11 = scalar_lea.sflag [#allocation3], 1
    %12 = vsyncpa %s11, 0
    %13 = vsyncpa [#allocation6], 0
    %14 = vsyncpa [#allocation4], 0
    %s15 = scalar_lea.sflag [#allocation4], 1
    %16 = vsyncpa %s15, 0
    loop: start=0, step=1, limit=6
    $region2: #{tpu_custom_call.1} parent=1 // loop_pre_header
      _
    $region3: #{tpu_custom_call.1} parent=1 // loop_header
      %s18 = sphi 0, %s22
      %p19 = scmp.ge.s32.totalorder %s18, 6
      %s25 = sphi 0, %s37
      %s26 = sphi 0, %s33
      %s27 = sphi 0, %s25
      %s28 = sphi 0, %s26
      %s29 = sphi 0, %s27
      %s30 = sphi 0, %s28
      %s42 = sphi 0, %s44
      %s45 = sphi 0, %s42
      %s46 = sphi 0, %s45
      %s62 = sphi 0, %s46
      %s66 = sphi 0, %s66
      %s68 = sphi 0, %s66
      %s69 = sphi 0, %s68
      %s83 = sphi 0, %s69
      %s87 = sphi 0, %s87
      %s89 = sphi 0, %s87
      %s90 = sphi 0, %s89
      %s104 = sphi 0, %s90
      %s108 = sphi 0, %s108
      %s110 = sphi 0, %s108
      %s111 = sphi 0, %s110
      %s125 = sphi 0, %s111
      %s129 = sphi 0, %s129
      %s131 = sphi 0, %s129
      %s132 = sphi 0, %s131
      %s146 = sphi 0, %s132
      %s154 = sphi 0, %s156
      %s157 = sphi 0, %s154
      %s158 = sphi 0, %s157
      %s174 = sphi 0, %s158
    $region4: #{tpu_custom_call.1} parent=1 // loop_header_branch
      %21 = sbr.rel (%p19) target = $region8
    $region5: #{tpu_custom_call.1} parent=1 // loop_body
      %s23 = ssub.s32 %s18, 1
      %s24 = ssub.s32 %s18, 2
      %s31 = sadd.s32 1, %s26
      %p32 = scmp.ge.s32.totalorder %s31, 2
      %s33 = scalar_select %p32, 0, %s31
      %s34 = sadd.s32 1, %s25
      %s35 = scalar_select %p32, %s34, %s25
      %p36 = scmp.ge.s32.totalorder %s35, 2
      %s37 = scalar_select %p36, 0, %s35
      %s38 = ssub.s32 %s25, %s37
      %s39 = ssub.s32 %s26, %s33
      %s40 = sor.u32 %s38, %s39
      %p41 = scmp.eq.s32.totalorder %s40, 0
      %s43 = sadd.s32 %s42, 1
      %s44 = scalar_select %p41, %s42, %s43
      %p47 = pneg %p41
      %p48 = scmp.eq.s32.totalorder %s18, 3
      %p49 = por %p47, %p48
      %p50 = scmp.ne.s32.totalorder %s42, %s45
      %p51 = scmp.eq.s32.totalorder %s18, 0
      %p52 = por %p50, %p51
      %p53 = scmp.ne.s32.totalorder %s42, %s45
      %p54 = scmp.eq.s32.totalorder %s23, 3
      %p55 = por %p53, %p54
      %p56 = scmp.ne.s32.totalorder %s45, %s46
      %p57 = scmp.eq.s32.totalorder %s23, 0
      %p58 = por %p56, %p57
      %p59 = scmp.ne.s32.totalorder %s45, %s46
      %p60 = scmp.eq.s32.totalorder %s24, 3
      %p61 = por %p59, %p60
      %p63 = scmp.ne.s32.totalorder %s46, %s62
      %p64 = scmp.eq.s32.totalorder %s24, 0
      %p65 = por %p63, %p64
      %s67 = sadd.s32 %s66, 1
      %p70 = scmp.eq.s32.totalorder %s18, 3
      %p71 = scmp.ne.s32.totalorder %s66, %s68
      %p72 = scmp.eq.s32.totalorder %s18, 0
      %p73 = por %p71, %p72
      %p74 = scmp.ne.s32.totalorder %s66, %s68
      %p75 = scmp.eq.s32.totalorder %s23, 3
      %p76 = por %p74, %p75
      %p77 = scmp.ne.s32.totalorder %s68, %s69
      %p78 = scmp.eq.s32.totalorder %s23, 0
      %p79 = por %p77, %p78
      %p80 = scmp.ne.s32.totalorder %s68, %s69
      %p81 = scmp.eq.s32.totalorder %s24, 3
      %p82 = por %p80, %p81
      %p84 = scmp.ne.s32.totalorder %s69, %s83
      %p85 = scmp.eq.s32.totalorder %s24, 0
      %p86 = por %p84, %p85
      %s88 = sadd.s32 %s87, 1
      %p91 = scmp.eq.s32.totalorder %s18, 3
      %p92 = scmp.ne.s32.totalorder %s87, %s89
      %p93 = scmp.eq.s32.totalorder %s18, 0
      %p94 = por %p92, %p93
      %p95 = scmp.ne.s32.totalorder %s87, %s89
      %p96 = scmp.eq.s32.totalorder %s23, 3
      %p97 = por %p95, %p96
      %p98 = scmp.ne.s32.totalorder %s89, %s90
      %p99 = scmp.eq.s32.totalorder %s23, 0
      %p100 = por %p98, %p99
      %p101 = scmp.ne.s32.totalorder %s89, %s90
      %p102 = scmp.eq.s32.totalorder %s24, 3
      %p103 = por %p101, %p102
      %p105 = scmp.ne.s32.totalorder %s90, %s104
      %p106 = scmp.eq.s32.totalorder %s24, 0
      %p107 = por %p105, %p106
      %s109 = sadd.s32 %s108, 1
      %p112 = scmp.eq.s32.totalorder %s18, 3
      %p113 = scmp.ne.s32.totalorder %s108, %s110
      %p114 = scmp.eq.s32.totalorder %s18, 0
      %p115 = por %p113, %p114
      %p116 = scmp.ne.s32.totalorder %s108, %s110
      %p117 = scmp.eq.s32.totalorder %s23, 3
      %p118 = por %p116, %p117
      %p119 = scmp.ne.s32.totalorder %s110, %s111
      %p120 = scmp.eq.s32.totalorder %s23, 0
      %p121 = por %p119, %p120
      %p122 = scmp.ne.s32.totalorder %s110, %s111
      %p123 = scmp.eq.s32.totalorder %s24, 3
      %p124 = por %p122, %p123
      %p126 = scmp.ne.s32.totalorder %s111, %s125
      %p127 = scmp.eq.s32.totalorder %s24, 0
      %p128 = por %p126, %p127
      %s130 = sadd.s32 %s129, 1
      %p133 = scmp.eq.s32.totalorder %s18, 3
      %p134 = scmp.ne.s32.totalorder %s129, %s131
      %p135 = scmp.eq.s32.totalorder %s18, 0
      %p136 = por %p134, %p135
      %p137 = scmp.ne.s32.totalorder %s129, %s131
      %p138 = scmp.eq.s32.totalorder %s23, 3
      %p139 = por %p137, %p138
      %p140 = scmp.ne.s32.totalorder %s131, %s132
      %p141 = scmp.eq.s32.totalorder %s23, 0
      %p142 = por %p140, %p141
      %p143 = scmp.ne.s32.totalorder %s131, %s132
      %p144 = scmp.eq.s32.totalorder %s24, 3
      %p145 = por %p143, %p144
      %p147 = scmp.ne.s32.totalorder %s132, %s146
      %p148 = scmp.eq.s32.totalorder %s24, 0
      %p149 = por %p147, %p148
      %s150 = ssub.s32 %s25, %s37
      %s151 = ssub.s32 %s26, %s33
      %s152 = sor.u32 %s150, %s151
      %p153 = scmp.eq.s32.totalorder %s152, 0
      %s155 = sadd.s32 %s154, 1
      %s156 = scalar_select %p153, %s154, %s155
      %p159 = pneg %p153
      %p160 = scmp.eq.s32.totalorder %s18, 3
      %p161 = por %p159, %p160
      %p162 = scmp.ne.s32.totalorder %s154, %s157
      %p163 = scmp.eq.s32.totalorder %s18, 0
      %p164 = por %p162, %p163
      %p165 = scmp.ne.s32.totalorder %s154, %s157
      %p166 = scmp.eq.s32.totalorder %s23, 3
      %p167 = por %p165, %p166
      %p168 = scmp.ne.s32.totalorder %s157, %s158
      %p169 = scmp.eq.s32.totalorder %s23, 0
      %p170 = por %p168, %p169
      %p171 = scmp.ne.s32.totalorder %s157, %s158
      %p172 = scmp.eq.s32.totalorder %s24, 3
      %p173 = por %p171, %p172
      %p175 = scmp.ne.s32.totalorder %s158, %s174
      %p176 = scmp.eq.s32.totalorder %s24, 0
      %p177 = por %p175, %p176
      %p178 = scmp.le.s32.totalorder 1, %s18
      %p179 = scmp.lt.s32.totalorder %s18, 5
      %p180 = pnand %p178, %p179
      %p181 = pneg %p180
      // Predicated region
      $region9: #{tpu_custom_call.1} parent=5 // pred_check
        _
      $region10: #{tpu_custom_call.1} parent=5 // pred_check_branch
        %183 = sbr.rel (%p180) target = $region12
      $region11: #{tpu_custom_call.1} parent=5 // pred_region
        %s184 = ssub.s32 %s18, 1
        // Predicated region
        $region13: #{tpu_custom_call.1} parent=11 // pred_check
          %p185 = pneg %p79
        $region14: #{tpu_custom_call.1} parent=11 // pred_check_branch
          %187 = sbr.rel (%p185) target = $region16
        $region15: #{tpu_custom_call.1} parent=11 // pred_region
          %s189 = ssub.s32 6144, 6144
          %190 = vsyncadd [#allocation6], %s189
          %s191 = sshll.u32 [#allocation5], 4
          %s192 = int_to_ptr.vmem [resolvable:$true] %s191
          %197 = dma.hbm_to_vmem [thread:$0]  %s1, 6144, %s192, [#allocation6], 128, 128, 8
        $region16: #{tpu_custom_call.1} parent=11 // pred_fallthru
          _
        // Predicated region
        $region17: #{tpu_custom_call.1} parent=11 // pred_check
          %p198 = pneg %p100
        $region18: #{tpu_custom_call.1} parent=11 // pred_check_branch
          %200 = sbr.rel (%p198) target = $region20
        $region19: #{tpu_custom_call.1} parent=11 // pred_region
          _
        $region20: #{tpu_custom_call.1} parent=11 // pred_fallthru
          _
        // Predicated region
        $region21: #{tpu_custom_call.1} parent=11 // pred_check
          %p201 = pneg %p121
        $region22: #{tpu_custom_call.1} parent=11 // pred_check_branch
          %203 = sbr.rel (%p201) target = $region24
        $region23: #{tpu_custom_call.1} parent=11 // pred_region
          %s205 = ssub.s32 2048, 2048
          %206 = vsyncadd [#allocation6], %s205
          %s207 = sshll.u32 [#allocation7], 4
          %s208 = int_to_ptr.vmem [resolvable:$true] %s207
          %213 = dma.hbm_to_vmem [thread:$0]  %s3, 2048, %s208, [#allocation6], 128, 128, 8
        $region24: #{tpu_custom_call.1} parent=11 // pred_fallthru
          _
        // Predicated region
        $region25: #{tpu_custom_call.1} parent=11 // pred_check
          %p214 = pneg %p142
        $region26: #{tpu_custom_call.1} parent=11 // pred_check_branch
          %216 = sbr.rel (%p214) target = $region28
        $region27: #{tpu_custom_call.1} parent=11 // pred_region
          _
        $region28: #{tpu_custom_call.1} parent=11 // pred_fallthru
          _
      $region12: #{tpu_custom_call.1} parent=5 // pred_fallthru
        _
      %p217 = scmp.lt.s32.totalorder %s18, 4
      // Predicated region
      $region29: #{tpu_custom_call.1} parent=5 // pred_check
        %p218 = pneg %p217
      $region30: #{tpu_custom_call.1} parent=5 // pred_check_branch
        %220 = sbr.rel (%p218) target = $region32
      $region31: #{tpu_custom_call.1} parent=5 // pred_region
        // Predicated region
        $region33: #{tpu_custom_call.1} parent=31 // pred_check
          %p221 = pneg %p52
        $region34: #{tpu_custom_call.1} parent=31 // pred_check_branch
          %223 = sbr.rel (%p221) target = $region36
        $region35: #{tpu_custom_call.1} parent=31 // pred_region
          %s224 = sand.u32 %s42, 1
          %s225 = scalar_lea.sflag [#allocation3], %s224
          %s226 = sand.u32 %s42, 1
          %s227 = smul.addr %s226, 16
          %s228 = scalar_lea.vmem [#allocation2], %s227
          %s230 = ssub.s32 256, 256
          %231 = vsyncadd %s225, %s230
          %s232 = smul.addr %s26, 2
          %s233 = smul.addr %s25, 4
          %s234 = sadd.s32 %s232, %s233
          %s235 = smul.addr %s234, 128
          %s236 = scalar_lea.hbm %s0, %s235
          %s237 = sshll.u32 %s228, 4
          %s238 = int_to_ptr.vmem [resolvable:$true] %s237
          %243 = dma.hbm_to_vmem [thread:$0]  %s236, 256, %s238, %s225, 128, 128, 8
        $region36: #{tpu_custom_call.1} parent=31 // pred_fallthru
          _
      $region32: #{tpu_custom_call.1} parent=5 // pred_fallthru
        _
      %p244 = scmp.le.s32.totalorder 1, %s18
      %p245 = scmp.lt.s32.totalorder %s18, 5
      %p246 = pnand %p244, %p245
      %p247 = pneg %p246
      // Predicated region
      $region37: #{tpu_custom_call.1} parent=5 // pred_check
        _
      $region38: #{tpu_custom_call.1} parent=5 // pred_check_branch
        %249 = sbr.rel (%p246) target = $region40
      $region39: #{tpu_custom_call.1} parent=5 // pred_region
        %s250 = ssub.s32 %s18, 1
        %s251 = sand.u32 %s45, 1
        %s252 = scalar_lea.sflag [#allocation3], %s251
        %s253 = sand.u32 %s45, 1
        %s254 = smul.addr %s253, 16
        %s255 = scalar_lea.vmem [#allocation2], %s254
        // Predicated region
        $region41: #{tpu_custom_call.1} parent=39 // pred_check
          %p256 = pneg %p58
        $region42: #{tpu_custom_call.1} parent=39 // pred_check_branch
          %258 = sbr.rel (%p256) target = $region44
        $region43: #{tpu_custom_call.1} parent=39 // pred_region
          %259 = dma.done %s252, 256
        $region44: #{tpu_custom_call.1} parent=39 // pred_fallthru
          _
        // Predicated region
        $region45: #{tpu_custom_call.1} parent=39 // pred_check
          %p260 = pneg %p79
        $region46: #{tpu_custom_call.1} parent=39 // pred_check_branch
          %262 = sbr.rel (%p260) target = $region48
        $region47: #{tpu_custom_call.1} parent=39 // pred_region
          %263 = dma.done [#allocation6], 6144
        $region48: #{tpu_custom_call.1} parent=39 // pred_fallthru
          _
        // Predicated region
        $region49: #{tpu_custom_call.1} parent=39 // pred_check
          %p264 = pneg %p121
        $region50: #{tpu_custom_call.1} parent=39 // pred_check_branch
          %266 = sbr.rel (%p264) target = $region52
        $region51: #{tpu_custom_call.1} parent=39 // pred_region
          %267 = dma.done [#allocation6], 2048
        $region52: #{tpu_custom_call.1} parent=39 // pred_fallthru
          _
        %s268 = sand.u32 %s45, 1
        %s269 = scalar_lea.sflag [#allocation3], %s268
        %s270 = sand.u32 %s45, 1
        %s271 = smul.addr %s270, 16
        %s272 = scalar_lea.vmem [#allocation2], %s271
        %p273 = pneg %p58
        %p274 = pneg %p55
        %p275 = pneg %p79
        %p276 = pneg %p76
        %p277 = pneg %p100
        %p278 = pneg %p97
        %p279 = pneg %p121
        %p280 = pneg %p118
        %p281 = pneg %p142
        %p282 = pneg %p139
        %p283 = pneg %p170
        %p284 = pneg %p167
        %s285 = sand.u32 %s157, 1
        %s286 = scalar_lea.sflag [#allocation4], %s285
        %s287 = sand.u32 %s157, 1
        %s288 = smul.addr %s287, 8
        %s289 = scalar_lea.vmem [#allocation8], %s288
        %v290 = vld [vmem:[%s255 + $0x8] sm:$0xff]
        %v291 = vld [vmem:[#allocation5] sm:$0xff]
        %v292 = vld [vmem:[#allocation5 + $0x8] sm:$0xff]
        %v293 = vld [vmem:[#allocation5 + $0x10] sm:$0xff]
        %v294 = vld [vmem:[#allocation5 + $0x18] sm:$0xff]
        %v295 = vld [vmem:[#allocation5 + $0x20] sm:$0xff]
        %v296 = vld [vmem:[#allocation5 + $0x28] sm:$0xff]
        %v297 = vld [vmem:[#allocation5 + $0x30] sm:$0xff]
        %v298 = vld [vmem:[#allocation5 + $0x38] sm:$0xff]
        %v299 = vld [vmem:[#allocation5 + $0x40] sm:$0xff]
        %v300 = vld [vmem:[#allocation5 + $0x48] sm:$0xff]
        %v301 = vld [vmem:[#allocation5 + $0x50] sm:$0xff]
        %v302 = vld [vmem:[#allocation5 + $0x58] sm:$0xff]
        %v303 = vld [vmem:[#allocation5 + $0x60] sm:$0xff]
        %v304 = vld [vmem:[#allocation5 + $0x68] sm:$0xff]
        %v305 = vld [vmem:[#allocation5 + $0x70] sm:$0xff]
        %v306 = vld [vmem:[#allocation5 + $0x78] sm:$0xff]
        %v307 = vld [vmem:[%s255 + $0x6] sm:$0xff]
        %s308 = scalar_lea.vmem [#allocation5], 128
        %v309 = vld [vmem:[%s308] sm:$0xff]
        %v310 = vld [vmem:[%s308 + $0x8] sm:$0xff]
        %v311 = vld [vmem:[%s308 + $0x10] sm:$0xff]
        %v312 = vld [vmem:[%s308 + $0x18] sm:$0xff]
        %v313 = vld [vmem:[%s308 + $0x20] sm:$0xff]
        %v314 = vld [vmem:[%s308 + $0x28] sm:$0xff]
        %v315 = vld [vmem:[%s308 + $0x30] sm:$0xff]
        %v316 = vld [vmem:[%s308 + $0x38] sm:$0xff]
        %v317 = vld [vmem:[%s308 + $0x40] sm:$0xff]
        %v318 = vld [vmem:[%s308 + $0x48] sm:$0xff]
        %v319 = vld [vmem:[%s308 + $0x50] sm:$0xff]
        %v320 = vld [vmem:[%s308 + $0x58] sm:$0xff]
        %v321 = vld [vmem:[%s308 + $0x60] sm:$0xff]
        %v322 = vld [vmem:[%s308 + $0x68] sm:$0xff]
        %v323 = vld [vmem:[%s308 + $0x70] sm:$0xff]
        %v324 = vld [vmem:[%s308 + $0x78] sm:$0xff]
        %325 = vmatprep.subr.mxu0 0.0
        %326 = vmatpush1.msra.mxu0 %v309
        %327 = vmatprep.subr.mxu0 0.0
        %328 = vmatpush1.msra.mxu0 %v310
        %329 = vmatprep.subr.mxu0 0.0
        %330 = vmatpush1.msra.mxu0 %v311
        %331 = vmatprep.subr.mxu0 0.0
        %332 = vmatpush1.msra.mxu0 %v312
        %333 = vmatprep.subr.mxu0 0.0
        %334 = vmatpush1.msra.mxu0 %v313
        %335 = vmatprep.subr.mxu0 0.0
        %336 = vmatpush1.msra.mxu0 %v314
        %337 = vmatprep.subr.mxu0 0.0
        %338 = vmatpush1.msra.mxu0 %v315
        %339 = vmatprep.subr.mxu0 0.0
        %340 = vmatpush1.msra.mxu0 %v316
        %341 = vmatprep.subr.mxu0 0.0
        %342 = vmatpush1.msra.mxu0 %v317
        %343 = vmatprep.subr.mxu0 0.0
        %344 = vmatpush1.msra.mxu0 %v318
        %345 = vmatprep.subr.mxu0 0.0
        %346 = vmatpush1.msra.mxu0 %v319
        %347 = vmatprep.subr.mxu0 0.0
        %348 = vmatpush1.msra.mxu0 %v320
        %349 = vmatprep.subr.mxu0 0.0
        %350 = vmatpush1.msra.mxu0 %v321
        %351 = vmatprep.subr.mxu0 0.0
        %352 = vmatpush1.msra.mxu0 %v322
        %353 = vmatprep.subr.mxu0 0.0
        %354 = vmatpush1.msra.mxu0 %v323
        %355 = vmatprep.subr.mxu0 0.0
        %356 = vmatpush1.msra.mxu0 %v324
        %357 = vmatprep.subr.mxu0 0.0
        %358 = vmatpush1.msra.mxu0 0.0
        %359 = vmatprep.subr.mxu0 0.0
        %360 = vmatpush1.msra.mxu0 0.0
        %361 = vmatprep.subr.mxu0 0.0
        %362 = vmatpush1.msra.mxu0 0.0
        %363 = vmatprep.subr.mxu0 0.0
        %364 = vmatpush1.msra.mxu0 0.0
        %365 = vmatprep.subr.mxu0 0.0
        %366 = vmatpush1.msra.mxu0 0.0
        %367 = vmatprep.subr.mxu0 0.0
        %368 = vmatpush1.msra.mxu0 0.0
        %369 = vmatprep.subr.mxu0 0.0
        %370 = vmatpush1.msra.mxu0 0.0
        %371 = vmatprep.subr.mxu0 0.0
        %372 = vmatpush1.msra.mxu0 0.0
        %373 = vmatprep.subr.mxu0 0.0
        %374 = vmatpush1.msra.mxu0 0.0
        %375 = vmatprep.subr.mxu0 0.0
        %376 = vmatpush1.msra.mxu0 0.0
        %377 = vmatprep.subr.mxu0 0.0
        %378 = vmatpush1.msra.mxu0 0.0
        %379 = vmatprep.subr.mxu0 0.0
        %380 = vmatpush1.msra.mxu0 0.0
        %381 = vmatprep.subr.mxu0 0.0
        %382 = vmatpush1.msra.mxu0 0.0
        %383 = vmatprep.subr.mxu0 0.0
        %384 = vmatpush1.msra.mxu0 0.0
        %385 = vmatprep.subr.mxu0 0.0
        %386 = vmatpush1.msra.mxu0 0.0
        %387 = vmatprep.subr.mxu0 0.0
        %388 = vmatpush1.msra.mxu0 0.0
        %389 = vmatprep.mubr.f32.mxu0 0.0
        %390 = vmatmul.mubr.f32.gmra.mrb[0].mxu0 %v307
        %v391 = vpop.f32.mrb[0].mxu0
        %v392 = vadd.f32 0.0, %v391
        %v393 = vpop.f32.mrb[0].mxu0
        %394 = vdwg.mxu0
        %395 = vmatprep.subr.mxu0 0.0
        %396 = vmatpush1.msra.mxu0 %v291
        %397 = vmatprep.subr.mxu0 0.0
        %398 = vmatpush1.msra.mxu0 %v292
        %399 = vmatprep.subr.mxu0 0.0
        %400 = vmatpush1.msra.mxu0 %v293
        %401 = vmatprep.subr.mxu0 0.0
        %402 = vmatpush1.msra.mxu0 %v294
        %403 = vmatprep.subr.mxu0 0.0
        %404 = vmatpush1.msra.mxu0 %v295
        %405 = vmatprep.subr.mxu0 0.0
        %406 = vmatpush1.msra.mxu0 %v296
        %407 = vmatprep.subr.mxu0 0.0
        %408 = vmatpush1.msra.mxu0 %v297
        %409 = vmatprep.subr.mxu0 0.0
        %410 = vmatpush1.msra.mxu0 %v298
        %411 = vmatprep.subr.mxu0 0.0
        %412 = vmatpush1.msra.mxu0 %v299
        %413 = vmatprep.subr.mxu0 0.0
        %414 = vmatpush1.msra.mxu0 %v300
        %415 = vmatprep.subr.mxu0 0.0
        %416 = vmatpush1.msra.mxu0 %v301
        %417 = vmatprep.subr.mxu0 0.0
        %418 = vmatpush1.msra.mxu0 %v302
        %419 = vmatprep.subr.mxu0 0.0
        %420 = vmatpush1.msra.mxu0 %v303
        %421 = vmatprep.subr.mxu0 0.0
        %422 = vmatpush1.msra.mxu0 %v304
        %423 = vmatprep.subr.mxu0 0.0
        %424 = vmatpush1.msra.mxu0 %v305
        %425 = vmatprep.subr.mxu0 0.0
        %426 = vmatpush1.msra.mxu0 %v306
        %427 = vmatprep.subr.mxu0 0.0
        %428 = vmatpush1.msra.mxu0 0.0
        %429 = vmatprep.subr.mxu0 0.0
        %430 = vmatpush1.msra.mxu0 0.0
        %431 = vmatprep.subr.mxu0 0.0
        %432 = vmatpush1.msra.mxu0 0.0
        %433 = vmatprep.subr.mxu0 0.0
        %434 = vmatpush1.msra.mxu0 0.0
        %435 = vmatprep.subr.mxu0 0.0
        %436 = vmatpush1.msra.mxu0 0.0
        %437 = vmatprep.subr.mxu0 0.0
        %438 = vmatpush1.msra.mxu0 0.0
        %439 = vmatprep.subr.mxu0 0.0
        %440 = vmatpush1.msra.mxu0 0.0
        %441 = vmatprep.subr.mxu0 0.0
        %442 = vmatpush1.msra.mxu0 0.0
        %443 = vmatprep.subr.mxu0 0.0
        %444 = vmatpush1.msra.mxu0 0.0
        %445 = vmatprep.subr.mxu0 0.0
        %446 = vmatpush1.msra.mxu0 0.0
        %447 = vmatprep.subr.mxu0 0.0
        %448 = vmatpush1.msra.mxu0 0.0
        %449 = vmatprep.subr.mxu0 0.0
        %450 = vmatpush1.msra.mxu0 0.0
        %451 = vmatprep.subr.mxu0 0.0
        %452 = vmatpush1.msra.mxu0 0.0
        %453 = vmatprep.subr.mxu0 0.0
        %454 = vmatpush1.msra.mxu0 0.0
        %455 = vmatprep.subr.mxu0 0.0
        %456 = vmatpush1.msra.mxu0 0.0
        %457 = vmatprep.subr.mxu0 0.0
        %458 = vmatpush1.msra.mxu0 0.0
        %459 = vmatprep.mubr.f32.mxu0 0.0
        %460 = vmatmul.mubr.f32.gmra.mrb[0].mxu0 %v290
        %v461 = vpop.f32.mrb[0].mxu0
        %v462 = vadd.f32 %v392, %v461
        %v463 = vpop.f32.mrb[0].mxu0
        %464 = vdwg.mxu0
        %v465 = vld [vmem:[%s255 + $0x4] sm:$0xff]
        %s466 = scalar_lea.vmem [#allocation5], 256
        %v467 = vld [vmem:[%s466] sm:$0xff]
        %v468 = vld [vmem:[%s466 + $0x8] sm:$0xff]
        %v469 = vld [vmem:[%s466 + $0x10] sm:$0xff]
        %v470 = vld [vmem:[%s466 + $0x18] sm:$0xff]
        %v471 = vld [vmem:[%s466 + $0x20] sm:$0xff]
        %v472 = vld [vmem:[%s466 + $0x28] sm:$0xff]
        %v473 = vld [vmem:[%s466 + $0x30] sm:$0xff]
        %v474 = vld [vmem:[%s466 + $0x38] sm:$0xff]
        %v475 = vld [vmem:[%s466 + $0x40] sm:$0xff]
        %v476 = vld [vmem:[%s466 + $0x48] sm:$0xff]
        %v477 = vld [vmem:[%s466 + $0x50] sm:$0xff]
        %v478 = vld [vmem:[%s466 + $0x58] sm:$0xff]
        %v479 = vld [vmem:[%s466 + $0x60] sm:$0xff]
        %v480 = vld [vmem:[%s466 + $0x68] sm:$0xff]
        %v481 = vld [vmem:[%s466 + $0x70] sm:$0xff]
        %v482 = vld [vmem:[%s466 + $0x78] sm:$0xff]
        %483 = vmatprep.subr.mxu0 0.0
        %484 = vmatpush1.msra.mxu0 %v467
        %485 = vmatprep.subr.mxu0 0.0
        %486 = vmatpush1.msra.mxu0 %v468
        %487 = vmatprep.subr.mxu0 0.0
        %488 = vmatpush1.msra.mxu0 %v469
        %489 = vmatprep.subr.mxu0 0.0
        %490 = vmatpush1.msra.mxu0 %v470
        %491 = vmatprep.subr.mxu0 0.0
        %492 = vmatpush1.msra.mxu0 %v471
        %493 = vmatprep.subr.mxu0 0.0
        %494 = vmatpush1.msra.mxu0 %v472
        %495 = vmatprep.subr.mxu0 0.0
        %496 = vmatpush1.msra.mxu0 %v473
        %497 = vmatprep.subr.mxu0 0.0
        %498 = vmatpush1.msra.mxu0 %v474
        %499 = vmatprep.subr.mxu0 0.0
        %500 = vmatpush1.msra.mxu0 %v475
        %501 = vmatprep.subr.mxu0 0.0
        %502 = vmatpush1.msra.mxu0 %v476
        %503 = vmatprep.subr.mxu0 0.0
        %504 = vmatpush1.msra.mxu0 %v477
        %505 = vmatprep.subr.mxu0 0.0
        %506 = vmatpush1.msra.mxu0 %v478
        %507 = vmatprep.subr.mxu0 0.0
        %508 = vmatpush1.msra.mxu0 %v479
        %509 = vmatprep.subr.mxu0 0.0
        %510 = vmatpush1.msra.mxu0 %v480
        %511 = vmatprep.subr.mxu0 0.0
        %512 = vmatpush1.msra.mxu0 %v481
        %513 = vmatprep.subr.mxu0 0.0
        %514 = vmatpush1.msra.mxu0 %v482
        %515 = vmatprep.subr.mxu0 0.0
        %516 = vmatpush1.msra.mxu0 0.0
        %517 = vmatprep.subr.mxu0 0.0
        %518 = vmatpush1.msra.mxu0 0.0
        %519 = vmatprep.subr.mxu0 0.0
        %520 = vmatpush1.msra.mxu0 0.0
        %521 = vmatprep.subr.mxu0 0.0
        %522 = vmatpush1.msra.mxu0 0.0
        %523 = vmatprep.subr.mxu0 0.0
        %524 = vmatpush1.msra.mxu0 0.0
        %525 = vmatprep.subr.mxu0 0.0
        %526 = vmatpush1.msra.mxu0 0.0
        %527 = vmatprep.subr.mxu0 0.0
        %528 = vmatpush1.msra.mxu0 0.0
        %529 = vmatprep.subr.mxu0 0.0
        %530 = vmatpush1.msra.mxu0 0.0
        %531 = vmatprep.subr.mxu0 0.0
        %532 = vmatpush1.msra.mxu0 0.0
        %533 = vmatprep.subr.mxu0 0.0
        %534 = vmatpush1.msra.mxu0 0.0
        %535 = vmatprep.subr.mxu0 0.0
        %536 = vmatpush1.msra.mxu0 0.0
        %537 = vmatprep.subr.mxu0 0.0
        %538 = vmatpush1.msra.mxu0 0.0
        %539 = vmatprep.subr.mxu0 0.0
        %540 = vmatpush1.msra.mxu0 0.0
        %541 = vmatprep.subr.mxu0 0.0
        %542 = vmatpush1.msra.mxu0 0.0
        %543 = vmatprep.subr.mxu0 0.0
        %544 = vmatpush1.msra.mxu0 0.0
        %545 = vmatprep.subr.mxu0 0.0
        %546 = vmatpush1.msra.mxu0 0.0
        %547 = vmatprep.mubr.f32.mxu0 0.0
        %548 = vmatmul.mubr.f32.gmra.mrb[0].mxu0 %v465
        %v549 = vpop.f32.mrb[0].mxu0
        %v550 = vadd.f32 0.0, %v549
        %v551 = vpop.f32.mrb[0].mxu0
        %552 = vdwg.mxu0
        %v553 = vadd.f32 %v462, %v550
        %v554 = vld [vmem:[%s2] sm:$0x1]
        %v556 = vlaneseq
        %v557 = vshrl.u32 %v556, 7
        %v558 = vsub.s32 0, %v557
        %v559 = vrot.slane %v554, %v558
        %v561 = vadd.f32 %v553, %v559
        %v562 = vmax.f32 %v561, 0.0
        %v563 = vld [vmem:[#allocation7] sm:$0xff]
        %v564 = vld [vmem:[#allocation7 + $0x8] sm:$0xff]
        %v565 = vld [vmem:[#allocation7 + $0x10] sm:$0xff]
        %v566 = vld [vmem:[#allocation7 + $0x18] sm:$0xff]
        %v567 = vld [vmem:[#allocation7 + $0x20] sm:$0xff]
        %v568 = vld [vmem:[#allocation7 + $0x28] sm:$0xff]
        %v569 = vld [vmem:[#allocation7 + $0x30] sm:$0xff]
        %v570 = vld [vmem:[#allocation7 + $0x38] sm:$0xff]
        %v571 = vld [vmem:[#allocation7 + $0x40] sm:$0xff]
        %v572 = vld [vmem:[#allocation7 + $0x48] sm:$0xff]
        %v573 = vld [vmem:[#allocation7 + $0x50] sm:$0xff]
        %v574 = vld [vmem:[#allocation7 + $0x58] sm:$0xff]
        %v575 = vld [vmem:[#allocation7 + $0x60] sm:$0xff]
        %v576 = vld [vmem:[#allocation7 + $0x68] sm:$0xff]
        %v577 = vld [vmem:[#allocation7 + $0x70] sm:$0xff]
        %v578 = vld [vmem:[#allocation7 + $0x78] sm:$0xff]
        %v579 = vld [vmem:[%s4] sm:$0x1]
        %v581 = vlaneseq
        %v582 = vshrl.u32 %v581, 7
        %v583 = vsub.s32 0, %v582
        %v584 = vrot.slane %v579, %v583
        %586 = vmatprep.subr.mxu0 0.0
        %587 = vmatpush1.msra.mxu0 %v563
        %588 = vmatprep.subr.mxu0 0.0
        %589 = vmatpush1.msra.mxu0 %v564
        %590 = vmatprep.subr.mxu0 0.0
        %591 = vmatpush1.msra.mxu0 %v565
        %592 = vmatprep.subr.mxu0 0.0
        %593 = vmatpush1.msra.mxu0 %v566
        %594 = vmatprep.subr.mxu0 0.0
        %595 = vmatpush1.msra.mxu0 %v567
        %596 = vmatprep.subr.mxu0 0.0
        %597 = vmatpush1.msra.mxu0 %v568
        %598 = vmatprep.subr.mxu0 0.0
        %599 = vmatpush1.msra.mxu0 %v569
        %600 = vmatprep.subr.mxu0 0.0
        %601 = vmatpush1.msra.mxu0 %v570
        %602 = vmatprep.subr.mxu0 0.0
        %603 = vmatpush1.msra.mxu0 %v571
        %604 = vmatprep.subr.mxu0 0.0
        %605 = vmatpush1.msra.mxu0 %v572
        %606 = vmatprep.subr.mxu0 0.0
        %607 = vmatpush1.msra.mxu0 %v573
        %608 = vmatprep.subr.mxu0 0.0
        %609 = vmatpush1.msra.mxu0 %v574
        %610 = vmatprep.subr.mxu0 0.0
        %611 = vmatpush1.msra.mxu0 %v575
        %612 = vmatprep.subr.mxu0 0.0
        %613 = vmatpush1.msra.mxu0 %v576
        %614 = vmatprep.subr.mxu0 0.0
        %615 = vmatpush1.msra.mxu0 %v577
        %616 = vmatprep.subr.mxu0 0.0
        %617 = vmatpush1.msra.mxu0 %v578
        %618 = vmatprep.subr.mxu0 0.0
        %619 = vmatpush1.msra.mxu0 0.0
        %620 = vmatprep.subr.mxu0 0.0
        %621 = vmatpush1.msra.mxu0 0.0
        %622 = vmatprep.subr.mxu0 0.0
        %623 = vmatpush1.msra.mxu0 0.0
        %624 = vmatprep.subr.mxu0 0.0
        %625 = vmatpush1.msra.mxu0 0.0
        %626 = vmatprep.subr.mxu0 0.0
        %627 = vmatpush1.msra.mxu0 0.0
        %628 = vmatprep.subr.mxu0 0.0
        %629 = vmatpush1.msra.mxu0 0.0
        %630 = vmatprep.subr.mxu0 0.0
        %631 = vmatpush1.msra.mxu0 0.0
        %632 = vmatprep.subr.mxu0 0.0
        %633 = vmatpush1.msra.mxu0 0.0
        %634 = vmatprep.subr.mxu0 0.0
        %635 = vmatpush1.msra.mxu0 0.0
        %636 = vmatprep.subr.mxu0 0.0
        %637 = vmatpush1.msra.mxu0 0.0
        %638 = vmatprep.subr.mxu0 0.0
        %639 = vmatpush1.msra.mxu0 0.0
        %640 = vmatprep.subr.mxu0 0.0
        %641 = vmatpush1.msra.mxu0 0.0
        %642 = vmatprep.subr.mxu0 0.0
        %643 = vmatpush1.msra.mxu0 0.0
        %644 = vmatprep.subr.mxu0 0.0
        %645 = vmatpush1.msra.mxu0 0.0
        %646 = vmatprep.subr.mxu0 0.0
        %647 = vmatpush1.msra.mxu0 0.0
        %648 = vmatprep.subr.mxu0 0.0
        %649 = vmatpush1.msra.mxu0 0.0
        %650 = vmatprep.mubr.f32.mxu0 0.0
        %651 = vmatmul.mubr.f32.gmra.mrb[0].mxu0 %v290
        %v652 = vpop.f32.mrb[0].mxu0
        %v653 = vadd.f32 %v584, %v652
        %v654 = vpop.f32.mrb[0].mxu0
        %655 = vdwg.mxu0
        %v656 = vadd.f32 %v562, %v653
        %v657 = vmax.f32 %v656, 0.0
        %658 = vst [vmem:[%s289] sm:$0xff] %v657
        %s659 = sand.u32 %s157, 1
        %s660 = scalar_lea.sflag [#allocation4], %s659
        %s661 = sand.u32 %s157, 1
        %s662 = smul.addr %s661, 8
        %s663 = scalar_lea.vmem [#allocation8], %s662
        // Predicated region
        $region53: #{tpu_custom_call.1} parent=39 // pred_check
          %p664 = pneg %p167
        $region54: #{tpu_custom_call.1} parent=39 // pred_check_branch
          %666 = sbr.rel (%p664) target = $region56
        $region55: #{tpu_custom_call.1} parent=39 // pred_region
          %s668 = ssub.s32 128, 128
          %669 = vsyncadd %s660, %s668
          %s670 = smul.addr %s27, 2
          %s671 = sadd.s32 %s28, %s670
          %s672 = smul.addr %s671, 128
          %s673 = scalar_lea.hbm %s5, %s672
          %s675 = sshll.u32 %s663, 4
          %s676 = int_to_ptr.vmem [resolvable:$true] %s675
          %678 = dma.vmem_to_hbm [thread:$0]  %s676, 128, %s673, %s660
        $region56: #{tpu_custom_call.1} parent=39 // pred_fallthru
          _
      $region40: #{tpu_custom_call.1} parent=5 // pred_fallthru
        _
      %p679 = scmp.le.s32.totalorder 2, %s18
      // Predicated region
      $region57: #{tpu_custom_call.1} parent=5 // pred_check
        %p680 = pneg %p679
      $region58: #{tpu_custom_call.1} parent=5 // pred_check_branch
        %682 = sbr.rel (%p680) target = $region60
      $region59: #{tpu_custom_call.1} parent=5 // pred_region
        %s683 = ssub.s32 %s18, 2
        // Predicated region
        $region61: #{tpu_custom_call.1} parent=59 // pred_check
          %p684 = pneg %p173
        $region62: #{tpu_custom_call.1} parent=59 // pred_check_branch
          %686 = sbr.rel (%p684) target = $region64
        $region63: #{tpu_custom_call.1} parent=59 // pred_region
          %s687 = sand.u32 %s158, 1
          %s688 = scalar_lea.sflag [#allocation4], %s687
          %s689 = sand.u32 %s158, 1
          %s690 = smul.addr %s689, 8
          %s691 = scalar_lea.vmem [#allocation8], %s690
          %692 = dma.done %s688, 128
        $region64: #{tpu_custom_call.1} parent=59 // pred_fallthru
          _
      $region60: #{tpu_custom_call.1} parent=5 // pred_fallthru
        _
    $region6: #{tpu_custom_call.1} parent=1 // loop_footer
      %s22 = sadd.s32 1, %s18
    $region7: #{tpu_custom_call.1} parent=1 // loop_footer_branch
      %17 = sbr.rel target = $region3
    $region8: #{tpu_custom_call.1} parent=1 // loop_exit
      _
    %693 = vsyncpa [#allocation3], 1
    %s694 = scalar_lea.sflag [#allocation3], 1
    %695 = vsyncpa %s694, 1
    %696 = vsyncpa [#allocation6], 1
    %697 = vsyncpa [#allocation4], 1
    %s698 = scalar_lea.sflag [#allocation4], 1
    %699 = vsyncpa %s698, 1

</llo_original>
